<compile_context>
chip_gen: v7x
topology: tpu7x:2x2x1
jax: 0.10.0
libtpu: 0.0.40
codegen_flags: <defaults>
</compile_context>

<pallas_src>
import functools

import jax
import jax.numpy as jnp
from jax.experimental import pallas as pl
from jax.experimental.pallas import tpu as pltpu


_VMEM_LIMIT = 32 * 1024 * 1024   # safe scoped-VMEM request on v5e / v6e / v7x


def _node_tile(n, target=256):
    """Row tile for the dst axis: whole array when small, else 256 (v7x-friendly)."""
    return n if n <= target else target


# ----------------------------- Pallas kernels ------------------------------ #

def _gat_project_kernel(feat_ref, wall_ref, wal_ref, war_ref,
                        z_ref, el_ref, er_ref):
    """Fused all-head projection for one row tile.

    z_all  = feat @ W_all        [T, H*Fout]  (one wide MXU matmul, bf16 out)
    el_col = feat @ (W_h a_l_h)  [T, H]       (attention vectors folded into W)
    er_col = feat @ (W_h a_r_h)  [T, H]
    """
    feat = feat_ref[...].astype(jnp.bfloat16)
    z = jnp.dot(feat, wall_ref[...], preferred_element_type=jnp.float32)
    z_ref[...] = z.astype(z_ref.dtype)
    el_ref[...] = jnp.dot(feat, wal_ref[...], preferred_element_type=jnp.float32)
    er_ref[...] = jnp.dot(feat, war_ref[...], preferred_element_type=jnp.float32)


def _gat_attend_kernel(adj_ref, z_ref, el_ref, er_ref, out_ref, *,
                       num_heads, head_dim, negative_slope,
                       activation, head_mean, log_softmax_out):
    """Masked edge softmax + aggregation for one destination-row tile, all heads."""
    # adj[dst, src] row block; mask compare done in f32 (v5e has no bf16 VPU).
    mask = adj_ref[...].astype(jnp.float32) > 0.0        # [T, N]
    z_all = z_ref[...]                                   # [N, H*Fout] bf16 (resident)
    el = el_ref[...]                                     # [H, N] f32 source logits
    er = er_ref[...]                                     # [T, H] f32 dest logits

    head_outs = []
    acc = None
    for h in range(num_heads):                           # static unroll, H is tiny
        z_h = z_all[:, h * head_dim:(h + 1) * head_dim]  # [N, Fout] bf16
        e = er[:, h:h + 1] + el[h:h + 1, :]              # [T, N] broadcast add (no XLU)
        e = jnp.where(e > 0, e, negative_slope * e)      # leaky_relu
        e = jnp.where(mask, e, -1e30)                    # mask non-edges
        m = jnp.max(e, axis=-1, keepdims=True)
        p = jnp.exp(e - m)                               # ~0 at non-edges
        denom = jnp.maximum(jnp.sum(p, axis=-1, keepdims=True), 1e-20)
        # Aggregate un-normalised, then scale once: one O(T*Fout) multiply instead
        # of an O(T*N) alpha normalisation; the divide goes to the EUP slot.
        rst = jnp.dot(p.astype(jnp.bfloat16), z_h,
                      preferred_element_type=jnp.float32)          # [T, Fout]
        rst = rst * pl.reciprocal(denom, approx=True)
        if head_mean:
            acc = rst if acc is None else acc + rst
        else:
            if activation == "elu":
                rst = jnp.where(rst > 0, rst, jnp.exp(rst) - 1.0)
            head_outs.append(rst)

    if head_mean:
        out = acc * (1.0 / num_heads)                    # .mean(1) over heads
        if log_softmax_out:                              # fused epilogue
            mx = jnp.max(out, axis=-1, keepdims=True)
            s = out - mx
            lse = jnp.log(jnp.sum(jnp.exp(s), axis=-1, keepdims=True))
            out = s - lse
        out_ref[...] = out
    else:
        # Single lane-dense store == .flatten(1); no wrapper transpose/reshape.
        out_ref[...] = jnp.concatenate(head_outs, axis=-1)


# ------------------------------ JAX wrappers -------------------------------- #

def gat_conv(feat, adj_bf16, w, attn_l, attn_r, *, negative_slope=0.2,
             activation=None, head_mean=False, log_softmax_out=False):
    """One GATConv layer.

    Returns [N, H*Fout] with heads flattened, or with head_mean=True the head
    mean [N, Fout] (optionally with log_softmax fused into the epilogue).
    """
    N, Fin = feat.shape
    H, _, Fout = w.shape

    # Tiny parameter folds (independent of N): all-head weight slab, and the
    # attention vectors folded into the projection so el/er come from matmuls.
    w_all = jnp.transpose(w, (1, 0, 2)).reshape(Fin, H * Fout).astype(jnp.bfloat16)
    wa_l = jnp.einsum("hio,ho->ih", w, attn_l[:, 0, :]).astype(jnp.bfloat16)   # [Fin, H]
    wa_r = jnp.einsum("hio,ho->ih", w, attn_r[:, 0, :]).astype(jnp.bfloat16)   # [Fin, H]

    tile = _node_tile(N)
    grid = (pl.cdiv(N, tile),)
    cparams = pltpu.CompilerParams(dimension_semantics=("parallel",),
                                   vmem_limit_bytes=_VMEM_LIMIT)

    z_all, el_col, er_col = pl.pallas_call(
        _gat_project_kernel,
        out_shape=(jax.ShapeDtypeStruct((N, H * Fout), jnp.bfloat16),
                   jax.ShapeDtypeStruct((N, H), jnp.float32),
                   jax.ShapeDtypeStruct((N, H), jnp.float32)),
        grid=grid,
        in_specs=[pl.BlockSpec((tile, Fin), lambda i: (i, 0)),       # features rows
                  pl.BlockSpec((Fin, H * Fout), lambda i: (0, 0)),   # W_all (resident)
                  pl.BlockSpec((Fin, H), lambda i: (0, 0)),          # folded attn_l
                  pl.BlockSpec((Fin, H), lambda i: (0, 0))],         # folded attn_r
        out_specs=(pl.BlockSpec((tile, H * Fout), lambda i: (i, 0)),
                   pl.BlockSpec((tile, H), lambda i: (i, 0)),
                   pl.BlockSpec((tile, H), lambda i: (i, 0))),
        compiler_params=cparams,
    )(feat, w_all, wa_l, wa_r)

    # Tiny [N, H] -> [H, N] layout fix, once per layer (N*H*4 bytes), so the
    # attention kernel never needs a per-tile XLU transpose of the source logits.
    el_row = el_col.T

    out_width = Fout if head_mean else H * Fout
    kernel = functools.partial(_gat_attend_kernel,
                               num_heads=H, head_dim=Fout,
                               negative_slope=negative_slope,
                               activation=activation,
                               head_mean=head_mean,
                               log_softmax_out=log_softmax_out)
    out = pl.pallas_call(
        kernel,
        out_shape=jax.ShapeDtypeStruct((N, out_width), jnp.float32),
        grid=grid,
        in_specs=[pl.BlockSpec((tile, N), lambda i: (i, 0)),         # adj row block (bf16)
                  pl.BlockSpec((N, H * Fout), lambda i: (0, 0)),     # z_all (resident)
                  pl.BlockSpec((H, N), lambda i: (0, 0)),            # el row (resident)
                  pl.BlockSpec((tile, H), lambda i: (i, 0))],        # er rows
        out_specs=pl.BlockSpec((tile, out_width), lambda i: (i, 0)),
        compiler_params=cparams,
    )(adj_bf16, z_all, el_row, er_col)
    return out


def init_gat_params(key, in_feats, n_hidden, n_classes, n_layers, heads):
    """Deterministic (xavier-ish) init matching GAT_model.__init__ shapes."""
    dims = [(in_feats, n_hidden, heads[0])]
    for i in range(1, n_layers):
        dims.append((n_hidden * heads[i - 1], n_hidden, heads[i]))
    dims.append((n_hidden * heads[n_layers - 1], n_classes, heads[n_layers]))

    params = []
    for (fin, fout, h) in dims:
        key, k1, k2, k3 = jax.random.split(key, 4)
        w = jax.random.normal(k1, (h, fin, fout), jnp.float32) * (jnp.sqrt(2.0) / jnp.sqrt(fin))
        al = jax.random.normal(k2, (h, 1, fout), jnp.float32) * 0.1
        ar = jax.random.normal(k3, (h, 1, fout), jnp.float32) * 0.1
        params.append((w, al, ar))
    return params


def gat_model_forward(adj, features, params, *, negative_slope=0.2):
    """Forward of GAT_model: hidden GATConv layers (ELU, heads flattened in-kernel),
    output GATConv with fused head-mean + log_softmax epilogue."""
    # TODO(synk): feat_drop / attn_drop are eval-mode identity here (no dropout).
    adj_bf = adj.astype(jnp.bfloat16)     # 0/1 exact in bf16; halves adj HBM/VMEM traffic
    h = features
    for l in range(len(params) - 1):
        w, al, ar = params[l]
        # Kernel output is already lane-dense [N, H*Fout] == .flatten(1).
        h = gat_conv(h, adj_bf, w, al, ar,
                     negative_slope=negative_slope, activation="elu")
    w, al, ar = params[-1]
    # Final layer: .mean(1) over heads + F.log_softmax fused into the kernel.
    return gat_conv(h, adj_bf, w, al, ar,
                    negative_slope=negative_slope, activation=None,
                    head_mean=True, log_softmax_out=True)


# ---------------------------------- main ------------------------------------ #

if __name__ == "__main__":
    key = jax.random.PRNGKey(0)
    N = 16                      # number of graph nodes
    in_feats, n_hidden, n_classes = 8, 8, 4
    n_layers = 2
    heads = [2, 2, 1]           # length n_layers + 1
    negative_slope = 0.2

    key, kf, ka, kp = jax.random.split(key, 4)
    features = jax.random.normal(kf, (N, in_feats), jnp.float32)
    adj = (jax.random.uniform(ka, (N, N)) < 0.3).astype(jnp.float32)
    adj = jnp.maximum(adj, jnp.eye(N, dtype=jnp.float32))   # self-loops (no empty rows)

    params = init_gat_params(kp, in_feats, n_hidden, n_classes, n_layers, heads)

    out = gat_model_forward(adj, features, params, negative_slope=negative_slope)
    out = jax.block_until_ready(out)

    assert out.shape == (N, n_classes), out.shape
    assert bool(jnp.all(jnp.isfinite(out)))
    # rows of log_softmax must exp-sum to 1
    assert bool(jnp.allclose(jnp.sum(jnp.exp(out), axis=-1), 1.0, atol=1e-3))
    print("KERNEL_OK")
</pallas_src>

<mosaic_0001>
module attributes {stable_mosaic.version = 11 : i64} {
  func.func @_gat_project_kernel(%arg0: i32, %arg1: memref<16x8xf32, #tpu.memory_space<vmem>>, %arg2: memref<8x16xbf16, #tpu.memory_space<vmem>>, %arg3: memref<8x2xbf16, #tpu.memory_space<vmem>>, %arg4: memref<8x2xbf16, #tpu.memory_space<vmem>>, %arg5: memref<16x16xbf16, #tpu.memory_space<vmem>>, %arg6: memref<16x2xf32, #tpu.memory_space<vmem>>, %arg7: memref<16x2xf32, #tpu.memory_space<vmem>>) attributes {dimension_semantics = [#tpu.dimension_semantics<parallel>], iteration_bounds = array<i64: 1>, scalar_prefetch = 0 : i64, scratch_operands = 0 : i64, tpu.core_type = #tpu.core_type<tc>, window_params = [{transform_indices = @transform_0, window_bounds = array<i64: 16, 8>}, {pipeline_mode = #tpu.pipeline_mode<synchronous>, transform_indices = @transform_1, window_bounds = array<i64: 8, 16>}, {pipeline_mode = #tpu.pipeline_mode<synchronous>, transform_indices = @transform_2, window_bounds = array<i64: 8, 2>}, {pipeline_mode = #tpu.pipeline_mode<synchronous>, transform_indices = @transform_3, window_bounds = array<i64: 8, 2>}, {transform_indices = @transform_4, window_bounds = array<i64: 16, 16>}, {transform_indices = @transform_5, window_bounds = array<i64: 16, 2>}, {transform_indices = @transform_6, window_bounds = array<i64: 16, 2>}]} {
    %c0 = arith.constant 0 : index
    %c0_0 = arith.constant 0 : index
    %0 = vector.load %arg1[%c0, %c0_0] : memref<16x8xf32, #tpu.memory_space<vmem>>, vector<16x8xf32>
    %1 = arith.truncf %0 : vector<16x8xf32> to vector<16x8xbf16>
    %c0_1 = arith.constant 0 : index
    %c0_2 = arith.constant 0 : index
    %2 = vector.load %arg2[%c0_1, %c0_2] : memref<8x16xbf16, #tpu.memory_space<vmem>>, vector<8x16xbf16>
    %cst = arith.constant dense<0.000000e+00> : vector<16x16xf32>
    %3 = tpu.matmul %1, %2, %cst {dimension_numbers = #tpu.dot_dimension_numbers<[1], [0], [0], [1], [0, 0, 1, 1], [], []>} : vector<16x8xbf16>, vector<8x16xbf16>, vector<16x16xf32> -> vector<16x16xf32>
    %4 = arith.truncf %3 : vector<16x16xf32> to vector<16x16xbf16>
    %c0_3 = arith.constant 0 : index
    %c0_4 = arith.constant 0 : index
    %5 = vector.load %arg5[%c0_3, %c0_4] : memref<16x16xbf16, #tpu.memory_space<vmem>>, vector<16x16xbf16>
    tpu.vector_store %arg5[%c0_3, %c0_4], %4 {strides = array<i32>} : memref<16x16xbf16, #tpu.memory_space<vmem>>, vector<16x16xbf16>,
    %c0_5 = arith.constant 0 : index
    %c0_6 = arith.constant 0 : index
    %6 = vector.load %arg3[%c0_5, %c0_6] : memref<8x2xbf16, #tpu.memory_space<vmem>>, vector<8x2xbf16>
    %cst_7 = arith.constant dense<0.000000e+00> : vector<16x2xf32>
    %7 = tpu.matmul %1, %6, %cst_7 {dimension_numbers = #tpu.dot_dimension_numbers<[1], [0], [0], [1], [0, 0, 1, 1], [], []>} : vector<16x8xbf16>, vector<8x2xbf16>, vector<16x2xf32> -> vector<16x2xf32>
    %c0_8 = arith.constant 0 : index
    %c0_9 = arith.constant 0 : index
    %8 = vector.load %arg6[%c0_8, %c0_9] : memref<16x2xf32, #tpu.memory_space<vmem>>, vector<16x2xf32>
    tpu.vector_store %arg6[%c0_8, %c0_9], %7 {strides = array<i32>} : memref<16x2xf32, #tpu.memory_space<vmem>>, vector<16x2xf32>,
    %c0_10 = arith.constant 0 : index
    %c0_11 = arith.constant 0 : index
    %9 = vector.load %arg4[%c0_10, %c0_11] : memref<8x2xbf16, #tpu.memory_space<vmem>>, vector<8x2xbf16>
    %cst_12 = arith.constant dense<0.000000e+00> : vector<16x2xf32>
    %10 = tpu.matmul %1, %9, %cst_12 {dimension_numbers = #tpu.dot_dimension_numbers<[1], [0], [0], [1], [0, 0, 1, 1], [], []>} : vector<16x8xbf16>, vector<8x2xbf16>, vector<16x2xf32> -> vector<16x2xf32>
    %c0_13 = arith.constant 0 : index
    %c0_14 = arith.constant 0 : index
    %11 = vector.load %arg7[%c0_13, %c0_14] : memref<16x2xf32, #tpu.memory_space<vmem>>, vector<16x2xf32>
    tpu.vector_store %arg7[%c0_13, %c0_14], %10 {strides = array<i32>} : memref<16x2xf32, #tpu.memory_space<vmem>>, vector<16x2xf32>,
    return
  }
  func.func @transform_0(%arg0: i32) -> (i32, i32) {
    %c0_i32 = arith.constant 0 : i32
    %c0_i32_0 = arith.constant 0 : i32
    return %arg0, %c0_i32 : i32, i32
  }
  func.func @transform_1(%arg0: i32) -> (i32, i32) {
    %c0_i32 = arith.constant 0 : i32
    %c0_i32_0 = arith.constant 0 : i32
    %c0_i32_1 = arith.constant 0 : i32
    return %c0_i32, %c0_i32_0 : i32, i32
  }
  func.func @transform_2(%arg0: i32) -> (i32, i32) {
    %c0_i32 = arith.constant 0 : i32
    %c0_i32_0 = arith.constant 0 : i32
    %c0_i32_1 = arith.constant 0 : i32
    return %c0_i32, %c0_i32_0 : i32, i32
  }
  func.func @transform_3(%arg0: i32) -> (i32, i32) {
    %c0_i32 = arith.constant 0 : i32
    %c0_i32_0 = arith.constant 0 : i32
    %c0_i32_1 = arith.constant 0 : i32
    return %c0_i32, %c0_i32_0 : i32, i32
  }
  func.func @transform_4(%arg0: i32) -> (i32, i32) {
    %c0_i32 = arith.constant 0 : i32
    %c0_i32_0 = arith.constant 0 : i32
    return %arg0, %c0_i32 : i32, i32
  }
  func.func @transform_5(%arg0: i32) -> (i32, i32) {
    %c0_i32 = arith.constant 0 : i32
    %c0_i32_0 = arith.constant 0 : i32
    return %arg0, %c0_i32 : i32, i32
  }
  func.func @transform_6(%arg0: i32) -> (i32, i32) {
    %c0_i32 = arith.constant 0 : i32
    %c0_i32_0 = arith.constant 0 : i32
    return %arg0, %c0_i32 : i32, i32
  }
}

</mosaic_0001>

<llo_original>
// kernel: tpu_custom_call.1
$region0: #{tpu_custom_call.1}
  #allocation0 [shape = 'u32[]', space=smem, size = 0x4, offset = 0x4, fixed_abs, tag = 'smem constant byte address 0x4 - core index']
  #allocation1 [shape = 'u32[144,128]{1,0:T(1,128)}', space=vmem, size = 0x12000, scoped, tag = 'internal scratch']
  %s0 = inlined_call_operand.vmem [shape: f32[16,8], index: 0, kind: input, shape index: {}]
  %s1 = inlined_call_operand.vmem [shape: bf16[8,16], index: 1, kind: input, shape index: {}]
  %s2 = inlined_call_operand.vmem [shape: bf16[8,2], index: 2, kind: input, shape index: {}]
  %s3 = inlined_call_operand.vmem [shape: bf16[8,2], index: 3, kind: input, shape index: {}]
  %s4 = inlined_call_operand.hbm [shape: bf16[16,16], index: 4, kind: output, shape index: {0}]
  %s5 = inlined_call_operand.vmem [shape: f32[16,2], index: 5, kind: output, shape index: {1}]
  %s6 = inlined_call_operand.vmem [shape: f32[16,2], index: 6, kind: output, shape index: {2}]
  %7 = xla_tuple %s4, %s5, %s6
  %s8 = sld [smem:[#allocation0]]
  $region42: #{tpu_custom_call.1} parent=0
    _
  %s10 = ssub.s32 1, %s8
  %s11 = scalar_select 0, %s10, %s8
  $region1: #{tpu_custom_call.1} parent=0
    #allocation2 [shape = 'u8[4096]{0}', space=vmem, size = 0x1000, scoped, tag = 'output window, operand 0, single buffered']
    #allocation3 [shape = 's32[1]{0}', space=sflag, size = 0x4, scoped, tag = 'scoped memory for tpu_custom_call.1']
    %12 = vsyncpa [#allocation3], 0
    // Predicated region
    $region2: #{tpu_custom_call.1} parent=1 // pred_check
      _
    $region3: #{tpu_custom_call.1} parent=1 // pred_check_branch
      %14 = sbr.rel (0) target = $region5
    $region4: #{tpu_custom_call.1} parent=1 // pred_region
      _
    $region5: #{tpu_custom_call.1} parent=1 // pred_fallthru
      _
    // Predicated region
    $region6: #{tpu_custom_call.1} parent=1 // pred_check
      _
    $region7: #{tpu_custom_call.1} parent=1 // pred_check_branch
      %16 = sbr.rel (0) target = $region9
    $region8: #{tpu_custom_call.1} parent=1 // pred_region
      _
    $region9: #{tpu_custom_call.1} parent=1 // pred_fallthru
      _
    // Predicated region
    $region10: #{tpu_custom_call.1} parent=1 // pred_check
      _
    $region11: #{tpu_custom_call.1} parent=1 // pred_check_branch
      %18 = sbr.rel (0) target = $region13
    $region12: #{tpu_custom_call.1} parent=1 // pred_region
      _
    $region13: #{tpu_custom_call.1} parent=1 // pred_fallthru
      _
    // Predicated region
    $region14: #{tpu_custom_call.1} parent=1 // pred_check
      _
    $region15: #{tpu_custom_call.1} parent=1 // pred_check_branch
      %20 = sbr.rel (0) target = $region17
    $region16: #{tpu_custom_call.1} parent=1 // pred_region
      _
    $region17: #{tpu_custom_call.1} parent=1 // pred_fallthru
      _
    %v22 = vld [vmem:[%s0] sm:$0xff]
    %v23 = vld [vmem:[%s0 + $0x8] sm:$0xff]
    %v24 = vpack.c.bf16 %v23, %v22
    %v25 = vld [vmem:[%s1] sm:$0xf]
    %vm26 = vcmask 64512
    %v28 = vsel %vm26, %v24, 0
    %vm30 = vcmask 1043456
    %v32 = vsel %vm30, %v25, 0
    %34 = vmatprep.subr.bf16.mxu0 0
    %35 = vmatpush1.bf16.msra.mxu0 %v32
    %36 = vmatprep.subr.bf16.mxu0 0
    %37 = vmatpush1.bf16.msra.mxu0 0
    %38 = vmatprep.subr.bf16.mxu0 0
    %39 = vmatpush1.bf16.msra.mxu0 0
    %40 = vmatprep.subr.bf16.mxu0 0
    %41 = vmatpush1.bf16.msra.mxu0 0
    %42 = vmatprep.subr.bf16.mxu0 0
    %43 = vmatpush1.bf16.msra.mxu0 0
    %44 = vmatprep.subr.bf16.mxu0 0
    %45 = vmatpush1.bf16.msra.mxu0 0
    %46 = vmatprep.subr.bf16.mxu0 0
    %47 = vmatpush1.bf16.msra.mxu0 0
    %48 = vmatprep.subr.bf16.mxu0 0
    %49 = vmatpush1.bf16.msra.mxu0 0
    %50 = vmatprep.subr.bf16.mxu0 0
    %51 = vmatpush1.bf16.msra.mxu0 0
    %52 = vmatprep.subr.bf16.mxu0 0
    %53 = vmatpush1.bf16.msra.mxu0 0
    %54 = vmatprep.subr.bf16.mxu0 0
    %55 = vmatpush1.bf16.msra.mxu0 0
    %56 = vmatprep.subr.bf16.mxu0 0
    %57 = vmatpush1.bf16.msra.mxu0 0
    %58 = vmatprep.subr.bf16.mxu0 0
    %59 = vmatpush1.bf16.msra.mxu0 0
    %60 = vmatprep.subr.bf16.mxu0 0
    %61 = vmatpush1.bf16.msra.mxu0 0
    %62 = vmatprep.subr.bf16.mxu0 0
    %63 = vmatpush1.bf16.msra.mxu0 0
    %64 = vmatprep.subr.bf16.mxu0 0
    %65 = vmatpush1.bf16.msra.mxu0 0
    %66 = vmatprep.mubr.bf16.mxu0 0
    %67 = vmatmul.mubr.bf16.gmra.mrb[0].mxu0 %v28
    %v68 = vpop.f32.mrb[0].mxu0
    %v69 = vadd.f32 0.0, %v68
    %v70 = vpop.f32.mrb[0].mxu0
    %v71 = vpop.f32.mrb[0].mxu0
    %v72 = vadd.f32 0.0, %v71
    %v73 = vpop.f32.mrb[0].mxu0
    %74 = vdwg.mxu0
    %v75 = vpack.c.bf16 %v72, %v69
    %v77 = vunpack.c.l.b16 %v75
    %v78 = vunpack.c.h.b16 %v75
    %v79 = vpack.c.b16 %v77, %v77
    %v80 = vpack.c.b16 %v78, %v78
    %vm83 = vcmask 125952
    %84 = vst.msk [vmem:[#allocation2] sm:$0xf] %vm83, %v79
    %85 = vst.msk [vmem:[#allocation2 + $0x4] sm:$0xf] %vm83, %v80
    %v86 = vld [vmem:[%s2] sm:$0xf]
    %v88 = vsel %vm30, %v86, 0
    %90 = vmatprep.subr.bf16.mxu0 0
    %91 = vmatpush1.bf16.msra.mxu0 %v88
    %92 = vmatprep.subr.bf16.mxu0 0
    %93 = vmatpush1.bf16.msra.mxu0 0
    %94 = vmatprep.subr.bf16.mxu0 0
    %95 = vmatpush1.bf16.msra.mxu0 0
    %96 = vmatprep.subr.bf16.mxu0 0
    %97 = vmatpush1.bf16.msra.mxu0 0
    %98 = vmatprep.subr.bf16.mxu0 0
    %99 = vmatpush1.bf16.msra.mxu0 0
    %100 = vmatprep.subr.bf16.mxu0 0
    %101 = vmatpush1.bf16.msra.mxu0 0
    %102 = vmatprep.subr.bf16.mxu0 0
    %103 = vmatpush1.bf16.msra.mxu0 0
    %104 = vmatprep.subr.bf16.mxu0 0
    %105 = vmatpush1.bf16.msra.mxu0 0
    %106 = vmatprep.subr.bf16.mxu0 0
    %107 = vmatpush1.bf16.msra.mxu0 0
    %108 = vmatprep.subr.bf16.mxu0 0
    %109 = vmatpush1.bf16.msra.mxu0 0
    %110 = vmatprep.subr.bf16.mxu0 0
    %111 = vmatpush1.bf16.msra.mxu0 0
    %112 = vmatprep.subr.bf16.mxu0 0
    %113 = vmatpush1.bf16.msra.mxu0 0
    %114 = vmatprep.subr.bf16.mxu0 0
    %115 = vmatpush1.bf16.msra.mxu0 0
    %116 = vmatprep.subr.bf16.mxu0 0
    %117 = vmatpush1.bf16.msra.mxu0 0
    %118 = vmatprep.subr.bf16.mxu0 0
    %119 = vmatpush1.bf16.msra.mxu0 0
    %120 = vmatprep.subr.bf16.mxu0 0
    %121 = vmatpush1.bf16.msra.mxu0 0
    %122 = vmatprep.mubr.bf16.mxu0 0
    %123 = vmatmul.mubr.bf16.gmra.mrb[0].mxu0 %v28
    %v124 = vpop.f32.mrb[0].mxu0
    %v125 = vadd.f32 0.0, %v124
    %v126 = vpop.f32.mrb[0].mxu0
    %v127 = vpop.f32.mrb[0].mxu0
    %v128 = vadd.f32 0.0, %v127
    %v129 = vpop.f32.mrb[0].mxu0
    %130 = vdwg.mxu0
    %vm131 = vcmask 15360
    %132 = vst.msk [vmem:[%s5] sm:$0xff] %vm131, %v125
    %133 = vst.msk [vmem:[%s5 + $0x8] sm:$0xff] %vm131, %v128
    %v134 = vld [vmem:[%s3] sm:$0xf]
    %v136 = vsel %vm30, %v134, 0
    %138 = vmatprep.subr.bf16.mxu0 0
    %139 = vmatpush1.bf16.msra.mxu0 %v136
    %140 = vmatprep.subr.bf16.mxu0 0
    %141 = vmatpush1.bf16.msra.mxu0 0
    %142 = vmatprep.subr.bf16.mxu0 0
    %143 = vmatpush1.bf16.msra.mxu0 0
    %144 = vmatprep.subr.bf16.mxu0 0
    %145 = vmatpush1.bf16.msra.mxu0 0
    %146 = vmatprep.subr.bf16.mxu0 0
    %147 = vmatpush1.bf16.msra.mxu0 0
    %148 = vmatprep.subr.bf16.mxu0 0
    %149 = vmatpush1.bf16.msra.mxu0 0
    %150 = vmatprep.subr.bf16.mxu0 0
    %151 = vmatpush1.bf16.msra.mxu0 0
    %152 = vmatprep.subr.bf16.mxu0 0
    %153 = vmatpush1.bf16.msra.mxu0 0
    %154 = vmatprep.subr.bf16.mxu0 0
    %155 = vmatpush1.bf16.msra.mxu0 0
    %156 = vmatprep.subr.bf16.mxu0 0
    %157 = vmatpush1.bf16.msra.mxu0 0
    %158 = vmatprep.subr.bf16.mxu0 0
    %159 = vmatpush1.bf16.msra.mxu0 0
    %160 = vmatprep.subr.bf16.mxu0 0
    %161 = vmatpush1.bf16.msra.mxu0 0
    %162 = vmatprep.subr.bf16.mxu0 0
    %163 = vmatpush1.bf16.msra.mxu0 0
    %164 = vmatprep.subr.bf16.mxu0 0
    %165 = vmatpush1.bf16.msra.mxu0 0
    %166 = vmatprep.subr.bf16.mxu0 0
    %167 = vmatpush1.bf16.msra.mxu0 0
    %168 = vmatprep.subr.bf16.mxu0 0
    %169 = vmatpush1.bf16.msra.mxu0 0
    %170 = vmatprep.mubr.bf16.mxu0 0
    %171 = vmatmul.mubr.bf16.gmra.mrb[0].mxu0 %v28
    %v172 = vpop.f32.mrb[0].mxu0
    %v173 = vadd.f32 0.0, %v172
    %v174 = vpop.f32.mrb[0].mxu0
    %v175 = vpop.f32.mrb[0].mxu0
    %v176 = vadd.f32 0.0, %v175
    %v177 = vpop.f32.mrb[0].mxu0
    %178 = vdwg.mxu0
    %179 = vst.msk [vmem:[%s6] sm:$0xff] %vm131, %v173
    %180 = vst.msk [vmem:[%s6 + $0x8] sm:$0xff] %vm131, %v176
    // Predicated region
    $region18: #{tpu_custom_call.1} parent=1 // pred_check
      _
    $region19: #{tpu_custom_call.1} parent=1 // pred_check_branch
      %182 = sbr.rel (0) target = $region21
    $region20: #{tpu_custom_call.1} parent=1 // pred_region
      %s184 = ssub.s32 128, 128
      %185 = vsyncadd [#allocation3], %s184
      %s186 = sshll.u32 [#allocation2], 4
      %s187 = int_to_ptr.vmem [resolvable:$true] %s186
      %192 = dma.vmem_to_hbm [thread:$0]  %s187, 128, %s4, [#allocation3], 64, 64, 4
    $region21: #{tpu_custom_call.1} parent=1 // pred_fallthru
      _
    // Predicated region
    $region22: #{tpu_custom_call.1} parent=1 // pred_check
      _
    $region23: #{tpu_custom_call.1} parent=1 // pred_check_branch
      %194 = sbr.rel (0) target = $region25
    $region24: #{tpu_custom_call.1} parent=1 // pred_region
      _
    $region25: #{tpu_custom_call.1} parent=1 // pred_fallthru
      _
    // Predicated region
    $region26: #{tpu_custom_call.1} parent=1 // pred_check
      _
    $region27: #{tpu_custom_call.1} parent=1 // pred_check_branch
      %196 = sbr.rel (0) target = $region29
    $region28: #{tpu_custom_call.1} parent=1 // pred_region
      _
    $region29: #{tpu_custom_call.1} parent=1 // pred_fallthru
      _
    // Predicated region
    $region30: #{tpu_custom_call.1} parent=1 // pred_check
      _
    $region31: #{tpu_custom_call.1} parent=1 // pred_check_branch
      %198 = sbr.rel (0) target = $region33
    $region32: #{tpu_custom_call.1} parent=1 // pred_region
      %199 = dma.done [#allocation3], 128
    $region33: #{tpu_custom_call.1} parent=1 // pred_fallthru
      _
    // Predicated region
    $region34: #{tpu_custom_call.1} parent=1 // pred_check
      _
    $region35: #{tpu_custom_call.1} parent=1 // pred_check_branch
      %201 = sbr.rel (0) target = $region37
    $region36: #{tpu_custom_call.1} parent=1 // pred_region
      _
    $region37: #{tpu_custom_call.1} parent=1 // pred_fallthru
      _
    // Predicated region
    $region38: #{tpu_custom_call.1} parent=1 // pred_check
      _
    $region39: #{tpu_custom_call.1} parent=1 // pred_check_branch
      %203 = sbr.rel (0) target = $region41
    $region40: #{tpu_custom_call.1} parent=1 // pred_region
      _
    $region41: #{tpu_custom_call.1} parent=1 // pred_fallthru
      _
    %204 = vsyncpa [#allocation3], 1

</llo_original>
